<compile_context>
chip_gen: v5e
topology: v5e:2x2
jax: 0.10.0
libtpu: 0.0.40
codegen_flags: <defaults>
</compile_context>

<pallas_src>
import functools

import jax
import jax.numpy as jnp
from jax.experimental import pallas as pl
from jax.experimental.pallas import tpu as pltpu


def _mpnn_kernel(a_ref, x_ref, w_ref, b_ref, o_ref, *, k, neg_slope,
                 compute_dtype):
    """One grid step: a block of `block_b` graphs.

    a_ref: (block_b, N, N)      adjacency block (compute_dtype)
    x_ref: (block_b, N, Din)    node-feature block (compute_dtype)
    w_ref: (k, Din, Dout)       hop-stacked projection weights (compute_dtype)
    b_ref: (1, Dout)            sum of per-hop biases (f32)
    o_ref: (block_b, N, Dout)   output block
    """
    block_b, n, din = x_ref.shape
    dout = o_ref.shape[-1]
    rows = block_b * n

    a = a_ref[...]                                  # (bb, N, N)
    z = x_ref[...].astype(jnp.float32)              # hop-carried features (f32)
    acc = jnp.zeros((rows, dout), jnp.float32)

    # Hop-carried propagation (batched over the graphs of this block) with
    # per-hop projections accumulated in f32.  No concat, no per-graph unroll.
    for kk in range(k):
        z = jnp.einsum("bij,bjd->bid", a, z.astype(compute_dtype),
                       preferred_element_type=jnp.float32)
        acc = acc + jnp.dot(z.astype(compute_dtype).reshape(rows, din),
                            w_ref[kk],
                            preferred_element_type=jnp.float32)

    acc = acc + b_ref[...].astype(jnp.float32)      # sum-of-biases, added once
    out = jnp.where(acc > 0, acc, neg_slope * acc)  # leaky_relu
    o_ref[...] = out.reshape(block_b, n, dout).astype(o_ref.dtype)  # one store


def mpnn_mk_forward(X, A, W, b, *, k, neg_slope=0.01, block_b=None,
                    compute_dtype=jnp.float32):
    """X: (B, N, Din), A: (B, N, N), W: (k, Din, Dout), b: (k, Dout).

    Computes leaky_relu(sum_kk (A^(kk+1) @ X) @ W[kk] + b[kk]).
    """
    B, N, Din = X.shape
    Dout = W.shape[-1]
    assert A.shape == (B, N, N)
    assert W.shape == (k, Din, Dout)
    assert b.shape == (k, Dout)

    out_dtype = X.dtype
    csize = jnp.dtype(compute_dtype).itemsize
    osize = jnp.dtype(out_dtype).itemsize

    # Cast MXU operands in the wrapper (halves DMA bytes + VMEM footprint for
    # the dominant A traffic when compute_dtype=bf16).  Bias stays f32.
    A_c = A.astype(compute_dtype)
    X_c = X.astype(compute_dtype)
    W_c = W.astype(compute_dtype)
    bsum = jnp.sum(b.astype(jnp.float32), axis=0).reshape(1, Dout)

    # --- generation-aware VMEM budget ---------------------------------------
    try:
        vmem_cap = int(getattr(pltpu.get_tpu_info(), "vmem_capacity_bytes",
                               64 << 20))
    except Exception:
        vmem_cap = 64 << 20                      # conservative: v7x per-TC VMEM
    # ~48 MiB on v7x (64 MiB), ~96 MiB on v5e/v6e (128 MiB).
    vmem_limit = min((vmem_cap * 3) // 4, vmem_cap - (4 << 20))
    block_budget = int(vmem_limit * 0.85)        # headroom for compiler scratch

    # Per-graph resident bytes: double-buffered A/X/out blocks plus live f32
    # hop features and accumulator.  Invariant operands (W, bias) are also
    # double-buffered by the BlockSpec pipeline.
    per_graph = (2 * N * N * csize + 2 * N * Din * csize
                 + 2 * N * Dout * osize + 4 * N * Din + 4 * N * Dout)
    invariant = 2 * k * Din * Dout * csize + 2 * Dout * 4
    max_bb_vmem = max(1, (block_budget - invariant) // per_graph)

    if block_b is None:
        # Keep >= 8 grid steps (>= 4 per v7x TensorCore) when the per-graph A
        # block is non-trivial so DMAs are hidden; for tiny graphs the ~0.35 us
        # per-step overhead dominates, so grow block_b toward B // 2 (still
        # >= 2 steps for the two v7x TensorCores).
        tiny = (N * N * csize) < (64 << 10)
        target_steps = max(1, min(B, 2 if tiny else 8))
        block_b = max(1, min(max_bb_vmem, B // target_steps))
    block_b = max(1, min(int(block_b), B, int(max_bb_vmem)))

    # Divisibility, preferring an even number of grid steps (clean 2-TC split).
    candidates = [bb for bb in range(block_b, 0, -1) if B % bb == 0]
    block_b = next((bb for bb in candidates if (B // bb) % 2 == 0),
                   candidates[0])
    grid = (B // block_b,)

    kernel = functools.partial(_mpnn_kernel, k=k, neg_slope=neg_slope,
                               compute_dtype=compute_dtype)

    # NOTE: output is written at its true width Dout (full-dim block): for
    # small Dout (<128) a masked vst beats 4x padded HBM bytes + a slice pass.
    # TODO(synk): for very large k*Din*Dout on v7x, single-buffer W via
    # pipeline_mode=pl.Buffered(1) to reclaim VMEM for bigger A blocks.
    return pl.pallas_call(
        kernel,
        out_shape=jax.ShapeDtypeStruct((B, N, Dout), out_dtype),
        grid_spec=pltpu.PrefetchScalarGridSpec(
            num_scalar_prefetch=0,
            grid=grid,
            in_specs=[
                pl.BlockSpec((block_b, N, N), lambda bi: (bi, 0, 0)),    # A
                pl.BlockSpec((block_b, N, Din), lambda bi: (bi, 0, 0)),  # X
                pl.BlockSpec((k, Din, Dout), lambda bi: (0, 0, 0)),      # W
                pl.BlockSpec((1, Dout), lambda bi: (0, 0)),              # bias
            ],
            out_specs=pl.BlockSpec((block_b, N, Dout), lambda bi: (bi, 0, 0)),
        ),
        compiler_params=pltpu.CompilerParams(
            dimension_semantics=("parallel",),
            vmem_limit_bytes=int(vmem_limit)),
    )(A_c, X_c, W_c, bsum)


def mpnn_mk_ref(X, A, W, b, *, k, neg_slope=0.01):
    """Pure-JAX reference mirroring the PyTorch forward."""
    outs = []
    A_pow = A
    for kk in range(k):
        if kk > 0:
            A_pow = jnp.einsum("bij,bjk->bik", A_pow, A)
        AX = jnp.einsum("bij,bjd->bid", A_pow, X)
        outs.append(AX @ W[kk] + b[kk])
    s = sum(outs)
    return jnp.where(s > 0, s, neg_slope * s)


if __name__ == "__main__":
    # Small shapes consistent with the module: batch=2, nodes=16,
    # input_dimension=32, output_dimension=32, k=3 hops.
    B, N, Din, Dout, K = 2, 16, 32, 32, 3

    key = jax.random.PRNGKey(0)
    kx, ka, kw, kb = jax.random.split(key, 4)

    X = jax.random.normal(kx, (B, N, Din), dtype=jnp.float32)
    A = jax.random.uniform(ka, (B, N, N), dtype=jnp.float32) / N  # ~row-normalized

    # nn.Linear-like init; W stored as (k, Din, Dout) so y = x @ W + b matches
    # PyTorch's x @ weight.T + bias.
    bound = 1.0 / (Din ** 0.5)
    W = jax.random.uniform(kw, (K, Din, Dout), minval=-bound, maxval=bound,
                           dtype=jnp.float32)
    bias = jax.random.uniform(kb, (K, Dout), minval=-bound, maxval=bound,
                              dtype=jnp.float32)

    ref = mpnn_mk_ref(X, A, W, bias, k=K)

    # f32 path: matches the reference up to summation-order differences.
    out = mpnn_mk_forward(X, A, W, bias, k=K)
    out = jax.block_until_ready(out)
    assert out.shape == (B, N, Dout)
    assert jnp.allclose(out, ref, atol=1e-4, rtol=1e-4), "f32 mismatch vs reference"

    # bf16-operand path (f32 hop carry + accumulation): looser tolerance.
    out_bf16 = mpnn_mk_forward(X, A, W, bias, k=K, compute_dtype=jnp.bfloat16)
    out_bf16 = jax.block_until_ready(out_bf16)
    assert jnp.allclose(out_bf16, ref, atol=1e-1, rtol=1e-1), "bf16 mismatch vs reference"

    print("KERNEL_OK")
</pallas_src>

<mosaic_0001>
module attributes {stable_mosaic.version = 11 : i64} {
  func.func @_mpnn_kernel(%arg0: i32, %arg1: memref<1x16x16xf32, #tpu.memory_space<vmem>>, %arg2: memref<1x16x32xf32, #tpu.memory_space<vmem>>, %arg3: memref<3x32x32xf32, #tpu.memory_space<vmem>>, %arg4: memref<1x32xf32, #tpu.memory_space<vmem>>, %arg5: memref<1x16x32xf32, #tpu.memory_space<vmem>>) attributes {dimension_semantics = [#tpu.dimension_semantics<parallel>], iteration_bounds = array<i64: 2>, scalar_prefetch = 0 : i64, scratch_operands = 0 : i64, tpu.core_type = #tpu.core_type<tc>, window_params = [{transform_indices = @transform_0, window_bounds = array<i64: 1, 16, 16>}, {transform_indices = @transform_1, window_bounds = array<i64: 1, 16, 32>}, {pipeline_mode = #tpu.pipeline_mode<synchronous>, transform_indices = @transform_2, window_bounds = array<i64: 3, 32, 32>}, {pipeline_mode = #tpu.pipeline_mode<synchronous>, transform_indices = @transform_3, window_bounds = array<i64: 1, 32>}, {transform_indices = @transform_4, window_bounds = array<i64: 1, 16, 32>}]} {
    %c0 = arith.constant 0 : index
    %c0_0 = arith.constant 0 : index
    %c0_1 = arith.constant 0 : index
    %0 = vector.load %arg1[%c0, %c0_0, %c0_1] : memref<1x16x16xf32, #tpu.memory_space<vmem>>, vector<1x16x16xf32>
    %c0_2 = arith.constant 0 : index
    %c0_3 = arith.constant 0 : index
    %c0_4 = arith.constant 0 : index
    %1 = vector.load %arg2[%c0_2, %c0_3, %c0_4] : memref<1x16x32xf32, #tpu.memory_space<vmem>>, vector<1x16x32xf32>
    %cst = arith.constant 0.000000e+00 : f32
    %2 = vector.broadcast %cst : f32 to vector<16x32xf32>
    "tpu.trace_start"() <{level = 10 : i32, message = "bij,bjd->bid"}> : () -> ()
    %cst_5 = arith.constant dense<0.000000e+00> : vector<1x16x32xf32>
    %3 = tpu.matmul %0, %1, %cst_5 {dimension_numbers = #tpu.dot_dimension_numbers<[2], [1], [1], [2], [0, 0, 0, 1, 1, 2], [0], [0]>} : vector<1x16x16xf32>, vector<1x16x32xf32>, vector<1x16x32xf32> -> vector<1x16x32xf32>
    "tpu.trace_stop"() : () -> ()
    %4 = vector.shape_cast %3 : vector<1x16x32xf32> to vector<16x32xf32>
    %c0_6 = arith.constant 0 : index
    %c0_7 = arith.constant 0 : index
    %c0_8 = arith.constant 0 : index
    %5 = vector.load %arg3[%c0_6, %c0_7, %c0_8] : memref<3x32x32xf32, #tpu.memory_space<vmem>>, vector<1x32x32xf32>
    %6 = vector.shape_cast %5 : vector<1x32x32xf32> to vector<32x32xf32>
    %cst_9 = arith.constant dense<0.000000e+00> : vector<16x32xf32>
    %7 = tpu.matmul %4, %6, %cst_9 {dimension_numbers = #tpu.dot_dimension_numbers<[1], [0], [0], [1], [0, 0, 1, 1], [], []>} : vector<16x32xf32>, vector<32x32xf32>, vector<16x32xf32> -> vector<16x32xf32>
    %8 = arith.addf %2, %7 : vector<16x32xf32>
    "tpu.trace_start"() <{level = 10 : i32, message = "bij,bjd->bid"}> : () -> ()
    %cst_10 = arith.constant dense<0.000000e+00> : vector<1x16x32xf32>
    %9 = tpu.matmul %0, %3, %cst_10 {dimension_numbers = #tpu.dot_dimension_numbers<[2], [1], [1], [2], [0, 0, 0, 1, 1, 2], [0], [0]>} : vector<1x16x16xf32>, vector<1x16x32xf32>, vector<1x16x32xf32> -> vector<1x16x32xf32>
    "tpu.trace_stop"() : () -> ()
    %10 = vector.shape_cast %9 : vector<1x16x32xf32> to vector<16x32xf32>
    %c1 = arith.constant 1 : index
    %c0_11 = arith.constant 0 : index
    %c0_12 = arith.constant 0 : index
    %11 = vector.load %arg3[%c1, %c0_11, %c0_12] : memref<3x32x32xf32, #tpu.memory_space<vmem>>, vector<1x32x32xf32>
    %12 = vector.shape_cast %11 : vector<1x32x32xf32> to vector<32x32xf32>
    %cst_13 = arith.constant dense<0.000000e+00> : vector<16x32xf32>
    %13 = tpu.matmul %10, %12, %cst_13 {dimension_numbers = #tpu.dot_dimension_numbers<[1], [0], [0], [1], [0, 0, 1, 1], [], []>} : vector<16x32xf32>, vector<32x32xf32>, vector<16x32xf32> -> vector<16x32xf32>
    %14 = arith.addf %8, %13 : vector<16x32xf32>
    "tpu.trace_start"() <{level = 10 : i32, message = "bij,bjd->bid"}> : () -> ()
    %cst_14 = arith.constant dense<0.000000e+00> : vector<1x16x32xf32>
    %15 = tpu.matmul %0, %9, %cst_14 {dimension_numbers = #tpu.dot_dimension_numbers<[2], [1], [1], [2], [0, 0, 0, 1, 1, 2], [0], [0]>} : vector<1x16x16xf32>, vector<1x16x32xf32>, vector<1x16x32xf32> -> vector<1x16x32xf32>
    "tpu.trace_stop"() : () -> ()
    %16 = vector.shape_cast %15 : vector<1x16x32xf32> to vector<16x32xf32>
    %c2 = arith.constant 2 : index
    %c0_15 = arith.constant 0 : index
    %c0_16 = arith.constant 0 : index
    %17 = vector.load %arg3[%c2, %c0_15, %c0_16] : memref<3x32x32xf32, #tpu.memory_space<vmem>>, vector<1x32x32xf32>
    %18 = vector.shape_cast %17 : vector<1x32x32xf32> to vector<32x32xf32>
    %cst_17 = arith.constant dense<0.000000e+00> : vector<16x32xf32>
    %19 = tpu.matmul %16, %18, %cst_17 {dimension_numbers = #tpu.dot_dimension_numbers<[1], [0], [0], [1], [0, 0, 1, 1], [], []>} : vector<16x32xf32>, vector<32x32xf32>, vector<16x32xf32> -> vector<16x32xf32>
    %20 = arith.addf %14, %19 : vector<16x32xf32>
    %c0_18 = arith.constant 0 : index
    %c0_19 = arith.constant 0 : index
    %21 = vector.load %arg4[%c0_18, %c0_19] : memref<1x32xf32, #tpu.memory_space<vmem>>, vector<1x32xf32>
    %22 = vector.broadcast %21 : vector<1x32xf32> to vector<16x32xf32>
    %23 = arith.addf %20, %22 : vector<16x32xf32>
    %cst_20 = arith.constant 0.000000e+00 : f32
    %24 = vector.broadcast %cst_20 : f32 to vector<16x32xf32>
    %25 = arith.cmpf ogt, %23, %24 : vector<16x32xf32>
    %cst_21 = arith.constant 0.00999999977 : f32
    %26 = vector.broadcast %cst_21 : f32 to vector<16x32xf32>
    %27 = arith.mulf %26, %23 : vector<16x32xf32>
    %28 = arith.select %25, %23, %27 : vector<16x32xi1>, vector<16x32xf32>
    %29 = vector.shape_cast %28 : vector<16x32xf32> to vector<1x16x32xf32>
    %c0_22 = arith.constant 0 : index
    %c0_23 = arith.constant 0 : index
    %c0_24 = arith.constant 0 : index
    %30 = vector.load %arg5[%c0_22, %c0_23, %c0_24] : memref<1x16x32xf32, #tpu.memory_space<vmem>>, vector<1x16x32xf32>
    tpu.vector_store %arg5[%c0_22, %c0_23, %c0_24], %29 {strides = array<i32>} : memref<1x16x32xf32, #tpu.memory_space<vmem>>, vector<1x16x32xf32>,
    return
  }
  func.func @transform_0(%arg0: i32) -> (i32, i32, i32) {
    %c0_i32 = arith.constant 0 : i32
    %c0_i32_0 = arith.constant 0 : i32
    %c0_i32_1 = arith.constant 0 : i32
    return %arg0, %c0_i32, %c0_i32_0 : i32, i32, i32
  }
  func.func @transform_1(%arg0: i32) -> (i32, i32, i32) {
    %c0_i32 = arith.constant 0 : i32
    %c0_i32_0 = arith.constant 0 : i32
    %c0_i32_1 = arith.constant 0 : i32
    return %arg0, %c0_i32, %c0_i32_0 : i32, i32, i32
  }
  func.func @transform_2(%arg0: i32) -> (i32, i32, i32) {
    %c0_i32 = arith.constant 0 : i32
    %c0_i32_0 = arith.constant 0 : i32
    %c0_i32_1 = arith.constant 0 : i32
    %c0_i32_2 = arith.constant 0 : i32
    return %c0_i32, %c0_i32_0, %c0_i32_1 : i32, i32, i32
  }
  func.func @transform_3(%arg0: i32) -> (i32, i32) {
    %c0_i32 = arith.constant 0 : i32
    %c0_i32_0 = arith.constant 0 : i32
    %c0_i32_1 = arith.constant 0 : i32
    return %c0_i32, %c0_i32_0 : i32, i32
  }
  func.func @transform_4(%arg0: i32) -> (i32, i32, i32) {
    %c0_i32 = arith.constant 0 : i32
    %c0_i32_0 = arith.constant 0 : i32
    %c0_i32_1 = arith.constant 0 : i32
    return %arg0, %c0_i32, %c0_i32_0 : i32, i32, i32
  }
}

</mosaic_0001>

<llo_original>
// kernel: tpu_custom_call.1
$region0: #{tpu_custom_call.1}
  #allocation0 [shape = 'u32[]', space=smem, size = 0x4, offset = 0x4, fixed_abs, tag = 'smem constant byte address 0x4 - core index']
  #allocation1 [shape = 'u32[72,128]{1,0:T(1,128)}', space=vmem, size = 0x9000, scoped, tag = 'internal scratch']
  %s0 = inlined_call_operand.hbm [shape: f32[2,16,16], index: 0, kind: input, shape index: {}]
  %s1 = inlined_call_operand.hbm [shape: f32[2,16,32], index: 1, kind: input, shape index: {}]
  %s2 = inlined_call_operand.hbm [shape: f32[3,32,32], index: 2, kind: input, shape index: {}]
  %s3 = inlined_call_operand.vmem [shape: f32[1,32], index: 3, kind: input, shape index: {}]
  %s4 = inlined_call_operand.hbm [shape: f32[2,16,32], index: 4, kind: output, shape index: {}]
  %s5 = sld [smem:[#allocation0]]
  $region61: #{tpu_custom_call.1} parent=0
    _
  %s7 = ssub.s32 1, %s5
  %s8 = scalar_select 0, %s7, %s5
  $region1: #{tpu_custom_call.1} parent=0
    #allocation2 [shape = 'u8[16384]{0}', space=vmem, size = 0x4000, scoped, tag = 'input window, operand 0']
    #allocation3 [shape = 's32[2]{0}', space=sflag, size = 0x8, scoped, tag = 'scoped memory for tpu_custom_call.1']
    #allocation4 [shape = 's32[2]{0}', space=sflag, size = 0x8, scoped, tag = 'scoped memory for tpu_custom_call.1']
    #allocation5 [shape = 'u8[16384]{0}', space=vmem, size = 0x4000, scoped, tag = 'input window, operand 1']
    #allocation6 [shape = 's32[2]{0}', space=sflag, size = 0x8, scoped, tag = 'scoped memory for tpu_custom_call.1']
    #allocation7 [shape = 'u8[49152]{0}', space=vmem, size = 0xc000, scoped, tag = 'input window, operand 2, single buffered']
    #allocation8 [shape = 'u8[16384]{0}', space=vmem, size = 0x4000, scoped, tag = 'output window, operand 0']
    %9 = vsyncpa [#allocation3], 0
    %s10 = scalar_lea.sflag [#allocation3], 1
    %11 = vsyncpa %s10, 0
    %12 = vsyncpa [#allocation6], 0
    %s13 = scalar_lea.sflag [#allocation6], 1
    %14 = vsyncpa %s13, 0
    %15 = vsyncpa [#allocation4], 0
    %s16 = scalar_lea.sflag [#allocation4], 1
    %17 = vsyncpa %s16, 0
    loop: start=0, step=1, limit=4
    $region2: #{tpu_custom_call.1} parent=1 // loop_pre_header
      _
    $region3: #{tpu_custom_call.1} parent=1 // loop_header
      %s19 = sphi 0, %s23
      %p20 = scmp.ge.s32.totalorder %s19, 4
      %s29 = sphi 0, %s31
      %s32 = sphi 0, %s29
      %s33 = sphi 0, %s32
      %s49 = sphi 0, %s33
      %s55 = sphi 0, %s57
      %s58 = sphi 0, %s55
      %s59 = sphi 0, %s58
      %s75 = sphi 0, %s59
      %s79 = sphi 0, %s79
      %s81 = sphi 0, %s79
      %s82 = sphi 0, %s81
      %s96 = sphi 0, %s82
      %s100 = sphi 0, %s100
      %s102 = sphi 0, %s100
      %s103 = sphi 0, %s102
      %s117 = sphi 0, %s103
      %s123 = sphi 0, %s125
      %s126 = sphi 0, %s123
      %s127 = sphi 0, %s126
      %s143 = sphi 0, %s127
    $region4: #{tpu_custom_call.1} parent=1 // loop_header_branch
      %22 = sbr.rel (%p20) target = $region8
    $region5: #{tpu_custom_call.1} parent=1 // loop_body
      %s24 = ssub.s32 %s19, 1
      %s25 = ssub.s32 %s19, 2
      %s26 = sadd.s32 %s19, 1
      %s27 = ssub.s32 %s19, %s26
      %p28 = scmp.eq.s32.totalorder %s27, 0
      %s30 = sadd.s32 %s29, 1
      %s31 = scalar_select %p28, %s29, %s30
      %p34 = pneg %p28
      %p35 = scmp.eq.s32.totalorder %s19, 1
      %p36 = por %p34, %p35
      %p37 = scmp.ne.s32.totalorder %s29, %s32
      %p38 = scmp.eq.s32.totalorder %s19, 0
      %p39 = por %p37, %p38
      %p40 = scmp.ne.s32.totalorder %s29, %s32
      %p41 = scmp.eq.s32.totalorder %s24, 1
      %p42 = por %p40, %p41
      %p43 = scmp.ne.s32.totalorder %s32, %s33
      %p44 = scmp.eq.s32.totalorder %s24, 0
      %p45 = por %p43, %p44
      %p46 = scmp.ne.s32.totalorder %s32, %s33
      %p47 = scmp.eq.s32.totalorder %s25, 1
      %p48 = por %p46, %p47
      %p50 = scmp.ne.s32.totalorder %s33, %s49
      %p51 = scmp.eq.s32.totalorder %s25, 0
      %p52 = por %p50, %p51
      %s53 = ssub.s32 %s19, %s26
      %p54 = scmp.eq.s32.totalorder %s53, 0
      %s56 = sadd.s32 %s55, 1
      %s57 = scalar_select %p54, %s55, %s56
      %p60 = pneg %p54
      %p61 = scmp.eq.s32.totalorder %s19, 1
      %p62 = por %p60, %p61
      %p63 = scmp.ne.s32.totalorder %s55, %s58
      %p64 = scmp.eq.s32.totalorder %s19, 0
      %p65 = por %p63, %p64
      %p66 = scmp.ne.s32.totalorder %s55, %s58
      %p67 = scmp.eq.s32.totalorder %s24, 1
      %p68 = por %p66, %p67
      %p69 = scmp.ne.s32.totalorder %s58, %s59
      %p70 = scmp.eq.s32.totalorder %s24, 0
      %p71 = por %p69, %p70
      %p72 = scmp.ne.s32.totalorder %s58, %s59
      %p73 = scmp.eq.s32.totalorder %s25, 1
      %p74 = por %p72, %p73
      %p76 = scmp.ne.s32.totalorder %s59, %s75
      %p77 = scmp.eq.s32.totalorder %s25, 0
      %p78 = por %p76, %p77
      %s80 = sadd.s32 %s79, 1
      %p83 = scmp.eq.s32.totalorder %s19, 1
      %p84 = scmp.ne.s32.totalorder %s79, %s81
      %p85 = scmp.eq.s32.totalorder %s19, 0
      %p86 = por %p84, %p85
      %p87 = scmp.ne.s32.totalorder %s79, %s81
      %p88 = scmp.eq.s32.totalorder %s24, 1
      %p89 = por %p87, %p88
      %p90 = scmp.ne.s32.totalorder %s81, %s82
      %p91 = scmp.eq.s32.totalorder %s24, 0
      %p92 = por %p90, %p91
      %p93 = scmp.ne.s32.totalorder %s81, %s82
      %p94 = scmp.eq.s32.totalorder %s25, 1
      %p95 = por %p93, %p94
      %p97 = scmp.ne.s32.totalorder %s82, %s96
      %p98 = scmp.eq.s32.totalorder %s25, 0
      %p99 = por %p97, %p98
      %s101 = sadd.s32 %s100, 1
      %p104 = scmp.eq.s32.totalorder %s19, 1
      %p105 = scmp.ne.s32.totalorder %s100, %s102
      %p106 = scmp.eq.s32.totalorder %s19, 0
      %p107 = por %p105, %p106
      %p108 = scmp.ne.s32.totalorder %s100, %s102
      %p109 = scmp.eq.s32.totalorder %s24, 1
      %p110 = por %p108, %p109
      %p111 = scmp.ne.s32.totalorder %s102, %s103
      %p112 = scmp.eq.s32.totalorder %s24, 0
      %p113 = por %p111, %p112
      %p114 = scmp.ne.s32.totalorder %s102, %s103
      %p115 = scmp.eq.s32.totalorder %s25, 1
      %p116 = por %p114, %p115
      %p118 = scmp.ne.s32.totalorder %s103, %s117
      %p119 = scmp.eq.s32.totalorder %s25, 0
      %p120 = por %p118, %p119
      %s121 = ssub.s32 %s19, %s26
      %p122 = scmp.eq.s32.totalorder %s121, 0
      %s124 = sadd.s32 %s123, 1
      %s125 = scalar_select %p122, %s123, %s124
      %p128 = pneg %p122
      %p129 = scmp.eq.s32.totalorder %s19, 1
      %p130 = por %p128, %p129
      %p131 = scmp.ne.s32.totalorder %s123, %s126
      %p132 = scmp.eq.s32.totalorder %s19, 0
      %p133 = por %p131, %p132
      %p134 = scmp.ne.s32.totalorder %s123, %s126
      %p135 = scmp.eq.s32.totalorder %s24, 1
      %p136 = por %p134, %p135
      %p137 = scmp.ne.s32.totalorder %s126, %s127
      %p138 = scmp.eq.s32.totalorder %s24, 0
      %p139 = por %p137, %p138
      %p140 = scmp.ne.s32.totalorder %s126, %s127
      %p141 = scmp.eq.s32.totalorder %s25, 1
      %p142 = por %p140, %p141
      %p144 = scmp.ne.s32.totalorder %s127, %s143
      %p145 = scmp.eq.s32.totalorder %s25, 0
      %p146 = por %p144, %p145
      %p147 = scmp.le.s32.totalorder 1, %s19
      %p148 = scmp.lt.s32.totalorder %s19, 3
      %p149 = pnand %p147, %p148
      %p150 = pneg %p149
      // Predicated region
      $region9: #{tpu_custom_call.1} parent=5 // pred_check
        _
      $region10: #{tpu_custom_call.1} parent=5 // pred_check_branch
        %152 = sbr.rel (%p149) target = $region12
      $region11: #{tpu_custom_call.1} parent=5 // pred_region
        %s153 = ssub.s32 %s19, 1
        // Predicated region
        $region13: #{tpu_custom_call.1} parent=11 // pred_check
          %p154 = pneg %p92
        $region14: #{tpu_custom_call.1} parent=11 // pred_check_branch
          %156 = sbr.rel (%p154) target = $region16
        $region15: #{tpu_custom_call.1} parent=11 // pred_region
          %158 = vsyncadd [#allocation6], 0
          %s159 = sshll.u32 %s2, 4
          %s160 = int_to_ptr.hbm [resolvable:$true] %s159
          %s161 = sshll.u32 [#allocation7], 4
          %s162 = int_to_ptr.vmem [resolvable:$true] %s161
          %167 = dma.hbm_to_vmem [thread:$0]  %s160, 1536, %s162, [#allocation6], 128, 128, 8
        $region16: #{tpu_custom_call.1} parent=11 // pred_fallthru
          _
        // Predicated region
        $region17: #{tpu_custom_call.1} parent=11 // pred_check
          %p168 = pneg %p113
        $region18: #{tpu_custom_call.1} parent=11 // pred_check_branch
          %170 = sbr.rel (%p168) target = $region20
        $region19: #{tpu_custom_call.1} parent=11 // pred_region
          _
        $region20: #{tpu_custom_call.1} parent=11 // pred_fallthru
          _
      $region12: #{tpu_custom_call.1} parent=5 // pred_fallthru
        _
      %p171 = scmp.lt.s32.totalorder %s19, 2
      // Predicated region
      $region21: #{tpu_custom_call.1} parent=5 // pred_check
        %p172 = pneg %p171
      $region22: #{tpu_custom_call.1} parent=5 // pred_check_branch
        %174 = sbr.rel (%p172) target = $region24
      $region23: #{tpu_custom_call.1} parent=5 // pred_region
        // Predicated region
        $region25: #{tpu_custom_call.1} parent=23 // pred_check
          %p175 = pneg %p39
        $region26: #{tpu_custom_call.1} parent=23 // pred_check_branch
          %177 = sbr.rel (%p175) target = $region28
        $region27: #{tpu_custom_call.1} parent=23 // pred_region
          %s178 = sand.u32 %s29, 1
          %s179 = scalar_lea.sflag [#allocation3], %s178
          %s180 = sand.u32 %s29, 1
          %s181 = smul.addr %s180, 16
          %s182 = scalar_lea.vmem [#allocation2], %s181
          %184 = vsyncadd %s179, 0
          %s185 = smul.addr %s19, 2
          %s186 = smul.addr %s185, 8
          %s187 = scalar_lea.hbm %s0, %s186
          %s188 = sshll.u32 %s187, 4
          %s189 = int_to_ptr.hbm [resolvable:$true] %s188
          %s190 = sshll.u32 %s182, 4
          %s191 = int_to_ptr.vmem [resolvable:$true] %s190
          %196 = dma.hbm_to_vmem [thread:$0]  %s189, 256, %s191, %s179, 128, 128, 8
        $region28: #{tpu_custom_call.1} parent=23 // pred_fallthru
          _
        // Predicated region
        $region29: #{tpu_custom_call.1} parent=23 // pred_check
          %p197 = pneg %p65
        $region30: #{tpu_custom_call.1} parent=23 // pred_check_branch
          %199 = sbr.rel (%p197) target = $region32
        $region31: #{tpu_custom_call.1} parent=23 // pred_region
          %s200 = sand.u32 %s19, 1
          %s201 = scalar_lea.sflag [#allocation6], %s200
          %s202 = sand.u32 %s55, 1
          %s203 = smul.addr %s202, 16
          %s204 = scalar_lea.vmem [#allocation5], %s203
          %206 = vsyncadd %s201, 0
          %s207 = smul.addr %s19, 2
          %s208 = smul.addr %s207, 8
          %s209 = scalar_lea.hbm %s1, %s208
          %s210 = sshll.u32 %s209, 4
          %s211 = int_to_ptr.hbm [resolvable:$true] %s210
          %s212 = sshll.u32 %s204, 4
          %s213 = int_to_ptr.vmem [resolvable:$true] %s212
          %218 = dma.hbm_to_vmem [thread:$0]  %s211, 256, %s213, %s201, 128, 128, 8
        $region32: #{tpu_custom_call.1} parent=23 // pred_fallthru
          _
      $region24: #{tpu_custom_call.1} parent=5 // pred_fallthru
        _
      %p219 = scmp.le.s32.totalorder 1, %s19
      %p220 = scmp.lt.s32.totalorder %s19, 3
      %p221 = pnand %p219, %p220
      %p222 = pneg %p221
      // Predicated region
      $region33: #{tpu_custom_call.1} parent=5 // pred_check
        _
      $region34: #{tpu_custom_call.1} parent=5 // pred_check_branch
        %224 = sbr.rel (%p221) target = $region36
      $region35: #{tpu_custom_call.1} parent=5 // pred_region
        %s225 = ssub.s32 %s19, 1
        %s226 = sand.u32 %s32, 1
        %s227 = scalar_lea.sflag [#allocation3], %s226
        %s228 = sand.u32 %s32, 1
        %s229 = smul.addr %s228, 16
        %s230 = scalar_lea.vmem [#allocation2], %s229
        // Predicated region
        $region37: #{tpu_custom_call.1} parent=35 // pred_check
          %p231 = pneg %p45
        $region38: #{tpu_custom_call.1} parent=35 // pred_check_branch
          %233 = sbr.rel (%p231) target = $region40
        $region39: #{tpu_custom_call.1} parent=35 // pred_region
          %235 = dma.done %s227, 256
        $region40: #{tpu_custom_call.1} parent=35 // pred_fallthru
          _
        %s236 = sand.u32 %s24, 1
        %s237 = scalar_lea.sflag [#allocation6], %s236
        %s238 = sand.u32 %s58, 1
        %s239 = smul.addr %s238, 16
        %s240 = scalar_lea.vmem [#allocation5], %s239
        // Predicated region
        $region41: #{tpu_custom_call.1} parent=35 // pred_check
          %p241 = pneg %p71
        $region42: #{tpu_custom_call.1} parent=35 // pred_check_branch
          %243 = sbr.rel (%p241) target = $region44
        $region43: #{tpu_custom_call.1} parent=35 // pred_region
          %245 = dma.done %s237, 256
        $region44: #{tpu_custom_call.1} parent=35 // pred_fallthru
          _
        // Predicated region
        $region45: #{tpu_custom_call.1} parent=35 // pred_check
          %p246 = pneg %p92
        $region46: #{tpu_custom_call.1} parent=35 // pred_check_branch
          %248 = sbr.rel (%p246) target = $region48
        $region47: #{tpu_custom_call.1} parent=35 // pred_region
          %250 = dma.done [#allocation6], 1536
        $region48: #{tpu_custom_call.1} parent=35 // pred_fallthru
          _
        %s251 = sand.u32 %s32, 1
        %s252 = scalar_lea.sflag [#allocation3], %s251
        %s253 = sand.u32 %s32, 1
        %s254 = smul.addr %s253, 16
        %s255 = scalar_lea.vmem [#allocation2], %s254
        %p256 = pneg %p45
        %p257 = pneg %p42
        %s258 = sand.u32 %s24, 1
        %s259 = scalar_lea.sflag [#allocation6], %s258
        %s260 = sand.u32 %s58, 1
        %s261 = smul.addr %s260, 16
        %s262 = scalar_lea.vmem [#allocation5], %s261
        %p263 = pneg %p71
        %p264 = pneg %p68
        %p265 = pneg %p92
        %p266 = pneg %p89
        %p267 = pneg %p113
        %p268 = pneg %p110
        %p269 = pneg %p139
        %p270 = pneg %p136
        %s271 = sand.u32 %s126, 1
        %s272 = scalar_lea.sflag [#allocation4], %s271
        %s273 = sand.u32 %s126, 1
        %s274 = smul.addr %s273, 16
        %s275 = scalar_lea.vmem [#allocation8], %s274
        %v276 = vld [vmem:[%s230] sm:$0xff]
        %v277 = vld [vmem:[%s230 + $0x8] sm:$0xff]
        %v278 = vld [vmem:[%s240] sm:$0xff]
        %v279 = vld [vmem:[%s240 + $0x8] sm:$0xff]
        %vm280 = vcmask 130048
        %v282 = vsel %vm280, %v276, 0
        %v285 = vsel %vm280, %v277, 0
        %287 = vmatpush.msra.mxu0 0.0
        %288 = vmatpush.msra.mxu0 0.0
        %289 = vmatpush.msra.mxu0 0.0
        %290 = vmatpush.msra.mxu0 0.0
        %291 = vmatpush.msra.mxu0 0.0
        %292 = vmatpush.msra.mxu0 0.0
        %293 = vmatpush.msra.mxu0 0.0
        %294 = vmatpush.msra.mxu0 0.0
        %295 = vmatpush.msra.mxu0 0.0
        %296 = vmatpush.msra.mxu0 0.0
        %297 = vmatpush.msra.mxu0 0.0
        %298 = vmatpush.msra.mxu0 0.0
        %299 = vmatpush.msra.mxu0 0.0
        %300 = vmatpush.msra.mxu0 0.0
        %301 = vmatpush.msra.mxu0 %v279
        %302 = vmatpush.msra.mxu0 %v278
        %303 = vmatmul.f32.gmra.mxu0 %v282
        %v304 = vpop.f32.mrf.mxu0
        %v305 = vadd.f32 0.0, %v304
        %306 = vmatmul.f32.gmra.mxu0 %v285
        %v307 = vpop.f32.mrf.mxu0
        %v308 = vadd.f32 0.0, %v307
        %309 = vdwg.mxu0
        %v310 = vld [vmem:[#allocation7] sm:$0xff]
        %v311 = vld [vmem:[#allocation7 + $0x8] sm:$0xff]
        %v312 = vld [vmem:[#allocation7 + $0x10] sm:$0xff]
        %v313 = vld [vmem:[#allocation7 + $0x18] sm:$0xff]
        %314 = vmatpush.msra.mxu0 0.0
        %315 = vmatpush.msra.mxu0 0.0
        %316 = vmatpush.msra.mxu0 0.0
        %317 = vmatpush.msra.mxu0 0.0
        %318 = vmatpush.msra.mxu0 0.0
        %319 = vmatpush.msra.mxu0 0.0
        %320 = vmatpush.msra.mxu0 0.0
        %321 = vmatpush.msra.mxu0 0.0
        %322 = vmatpush.msra.mxu0 0.0
        %323 = vmatpush.msra.mxu0 0.0
        %324 = vmatpush.msra.mxu0 0.0
        %325 = vmatpush.msra.mxu0 0.0
        %326 = vmatpush.msra.mxu0 0.0
        %327 = vmatpush.msra.mxu0 0.0
        %328 = vmatpush.msra.mxu0 %v308
        %329 = vmatpush.msra.mxu0 %v305
        %330 = vmatmul.f32.gmra.mxu0 %v282
        %v331 = vpop.f32.mrf.mxu0
        %v332 = vadd.f32 0.0, %v331
        %333 = vmatmul.f32.gmra.mxu0 %v285
        %v334 = vpop.f32.mrf.mxu0
        %v335 = vadd.f32 0.0, %v334
        %336 = vdwg.mxu0
        %s337 = scalar_lea.vmem [#allocation7], 32
        %v338 = vld [vmem:[%s337] sm:$0xff]
        %v339 = vld [vmem:[%s337 + $0x8] sm:$0xff]
        %v340 = vld [vmem:[%s337 + $0x10] sm:$0xff]
        %v341 = vld [vmem:[%s337 + $0x18] sm:$0xff]
        %vm342 = vcmask 261120
        %v344 = vsel %vm342, %v332, 0
        %v347 = vsel %vm342, %v335, 0
        %349 = vmatpush.msra.mxu0 0.0
        %350 = vmatpush.msra.mxu0 0.0
        %351 = vmatpush.msra.mxu0 0.0
        %352 = vmatpush.msra.mxu0 0.0
        %353 = vmatpush.msra.mxu0 0.0
        %354 = vmatpush.msra.mxu0 0.0
        %355 = vmatpush.msra.mxu0 0.0
        %356 = vmatpush.msra.mxu0 0.0
        %357 = vmatpush.msra.mxu0 0.0
        %358 = vmatpush.msra.mxu0 0.0
        %359 = vmatpush.msra.mxu0 0.0
        %360 = vmatpush.msra.mxu0 0.0
        %361 = vmatpush.msra.mxu0 %v341
        %362 = vmatpush.msra.mxu0 %v340
        %363 = vmatpush.msra.mxu0 %v339
        %364 = vmatpush.msra.mxu0 %v338
        %365 = vmatmul.f32.gmra.mxu0 %v344
        %v366 = vpop.f32.mrf.mxu0
        %v367 = vadd.f32 0.0, %v366
        %368 = vmatmul.f32.gmra.mxu0 %v347
        %v369 = vpop.f32.mrf.mxu0
        %v370 = vadd.f32 0.0, %v369
        %371 = vdwg.mxu0
        %v373 = vsel %vm342, %v305, 0
        %v376 = vsel %vm342, %v308, 0
        %378 = vmatpush.msra.mxu0 0.0
        %379 = vmatpush.msra.mxu0 0.0
        %380 = vmatpush.msra.mxu0 0.0
        %381 = vmatpush.msra.mxu0 0.0
        %382 = vmatpush.msra.mxu0 0.0
        %383 = vmatpush.msra.mxu0 0.0
        %384 = vmatpush.msra.mxu0 0.0
        %385 = vmatpush.msra.mxu0 0.0
        %386 = vmatpush.msra.mxu0 0.0
        %387 = vmatpush.msra.mxu0 0.0
        %388 = vmatpush.msra.mxu0 0.0
        %389 = vmatpush.msra.mxu0 0.0
        %390 = vmatpush.msra.mxu0 %v313
        %391 = vmatpush.msra.mxu0 %v312
        %392 = vmatpush.msra.mxu0 %v311
        %393 = vmatpush.msra.mxu0 %v310
        %394 = vmatmul.f32.gmra.mxu0 %v373
        %v395 = vpop.f32.mrf.mxu0
        %v396 = vadd.f32 %v367, %v395
        %397 = vmatmul.f32.gmra.mxu0 %v376
        %v398 = vpop.f32.mrf.mxu0
        %v399 = vadd.f32 %v370, %v398
        %400 = vdwg.mxu0
        %401 = vmatpush.msra.mxu0 0.0
        %402 = vmatpush.msra.mxu0 0.0
        %403 = vmatpush.msra.mxu0 0.0
        %404 = vmatpush.msra.mxu0 0.0
        %405 = vmatpush.msra.mxu0 0.0
        %406 = vmatpush.msra.mxu0 0.0
        %407 = vmatpush.msra.mxu0 0.0
        %408 = vmatpush.msra.mxu0 0.0
        %409 = vmatpush.msra.mxu0 0.0
        %410 = vmatpush.msra.mxu0 0.0
        %411 = vmatpush.msra.mxu0 0.0
        %412 = vmatpush.msra.mxu0 0.0
        %413 = vmatpush.msra.mxu0 0.0
        %414 = vmatpush.msra.mxu0 0.0
        %415 = vmatpush.msra.mxu0 %v335
        %416 = vmatpush.msra.mxu0 %v332
        %417 = vmatmul.f32.gmra.mxu0 %v282
        %v418 = vpop.f32.mrf.mxu0
        %v419 = vadd.f32 0.0, %v418
        %420 = vmatmul.f32.gmra.mxu0 %v285
        %v421 = vpop.f32.mrf.mxu0
        %v422 = vadd.f32 0.0, %v421
        %423 = vdwg.mxu0
        %s424 = scalar_lea.vmem [#allocation7], 64
        %v425 = vld [vmem:[%s424] sm:$0xff]
        %v426 = vld [vmem:[%s424 + $0x8] sm:$0xff]
        %v427 = vld [vmem:[%s424 + $0x10] sm:$0xff]
        %v428 = vld [vmem:[%s424 + $0x18] sm:$0xff]
        %v430 = vsel %vm342, %v419, 0
        %v433 = vsel %vm342, %v422, 0
        %435 = vmatpush.msra.mxu0 0.0
        %436 = vmatpush.msra.mxu0 0.0
        %437 = vmatpush.msra.mxu0 0.0
        %438 = vmatpush.msra.mxu0 0.0
        %439 = vmatpush.msra.mxu0 0.0
        %440 = vmatpush.msra.mxu0 0.0
        %441 = vmatpush.msra.mxu0 0.0
        %442 = vmatpush.msra.mxu0 0.0
        %443 = vmatpush.msra.mxu0 0.0
        %444 = vmatpush.msra.mxu0 0.0
        %445 = vmatpush.msra.mxu0 0.0
        %446 = vmatpush.msra.mxu0 0.0
        %447 = vmatpush.msra.mxu0 %v428
        %448 = vmatpush.msra.mxu0 %v427
        %449 = vmatpush.msra.mxu0 %v426
        %450 = vmatpush.msra.mxu0 %v425
        %451 = vmatmul.f32.gmra.mxu0 %v430
        %v452 = vpop.f32.mrf.mxu0
        %v453 = vadd.f32 0.0, %v452
        %454 = vmatmul.f32.gmra.mxu0 %v433
        %v455 = vpop.f32.mrf.mxu0
        %v456 = vadd.f32 0.0, %v455
        %457 = vdwg.mxu0
        %v458 = vadd.f32 %v396, %v453
        %v459 = vadd.f32 %v399, %v456
        %v460 = vld [vmem:[%s3] sm:$0x1]
        %v462 = vperm.slane %v460, 0
        %v464 = vadd.f32 %v458, %v462
        %v465 = vadd.f32 %v459, %v462
        %vm466 = vcmp.gt.f32.partialorder %v464, 0.0
        %vm467 = vcmp.gt.f32.partialorder %v465, 0.0
        %v468 = vmul.f32 %v464, 0.01
        %v469 = vmul.f32 %v465, 0.01
        %v470 = vsel %vm466, %v464, %v468
        %v471 = vsel %vm467, %v465, %v469
        %472 = vst.msk [vmem:[%s275] sm:$0xff] %vm342, %v470
        %473 = vst.msk [vmem:[%s275 + $0x8] sm:$0xff] %vm342, %v471
        %s474 = sand.u32 %s126, 1
        %s475 = scalar_lea.sflag [#allocation4], %s474
        %s476 = sand.u32 %s126, 1
        %s477 = smul.addr %s476, 16
        %s478 = scalar_lea.vmem [#allocation8], %s477
        // Predicated region
        $region49: #{tpu_custom_call.1} parent=35 // pred_check
          %p479 = pneg %p136
        $region50: #{tpu_custom_call.1} parent=35 // pred_check_branch
          %481 = sbr.rel (%p479) target = $region52
        $region51: #{tpu_custom_call.1} parent=35 // pred_region
          %483 = vsyncadd %s475, 0
          %s484 = smul.addr %s24, 2
          %s485 = smul.addr %s484, 8
          %s486 = scalar_lea.hbm %s4, %s485
          %s487 = sshll.u32 %s478, 4
          %s488 = int_to_ptr.vmem [resolvable:$true] %s487
          %s489 = sshll.u32 %s486, 4
          %s490 = int_to_ptr.hbm [resolvable:$true] %s489
          %495 = dma.vmem_to_hbm [thread:$0]  %s488, 256, %s490, %s475, 128, 128, 8
        $region52: #{tpu_custom_call.1} parent=35 // pred_fallthru
          _
      $region36: #{tpu_custom_call.1} parent=5 // pred_fallthru
        _
      %p496 = scmp.le.s32.totalorder 2, %s19
      // Predicated region
      $region53: #{tpu_custom_call.1} parent=5 // pred_check
        %p497 = pneg %p496
      $region54: #{tpu_custom_call.1} parent=5 // pred_check_branch
        %499 = sbr.rel (%p497) target = $region56
      $region55: #{tpu_custom_call.1} parent=5 // pred_region
        %s500 = ssub.s32 %s19, 2
        // Predicated region
        $region57: #{tpu_custom_call.1} parent=55 // pred_check
          %p501 = pneg %p142
        $region58: #{tpu_custom_call.1} parent=55 // pred_check_branch
          %503 = sbr.rel (%p501) target = $region60
        $region59: #{tpu_custom_call.1} parent=55 // pred_region
          %s504 = sand.u32 %s127, 1
          %s505 = scalar_lea.sflag [#allocation4], %s504
          %s506 = sand.u32 %s127, 1
          %s507 = smul.addr %s506, 16
          %s508 = scalar_lea.vmem [#allocation8], %s507
          %510 = dma.done %s505, 256
        $region60: #{tpu_custom_call.1} parent=55 // pred_fallthru
          _
      $region56: #{tpu_custom_call.1} parent=5 // pred_fallthru
        _
    $region6: #{tpu_custom_call.1} parent=1 // loop_footer
      %s23 = sadd.s32 1, %s19
    $region7: #{tpu_custom_call.1} parent=1 // loop_footer_branch
      %18 = sbr.rel target = $region3
    $region8: #{tpu_custom_call.1} parent=1 // loop_exit
      _
    %511 = vsyncpa [#allocation3], 1
    %s512 = scalar_lea.sflag [#allocation3], 1
    %513 = vsyncpa %s512, 1
    %514 = vsyncpa [#allocation6], 1
    %s515 = scalar_lea.sflag [#allocation6], 1
    %516 = vsyncpa %s515, 1
    %517 = vsyncpa [#allocation4], 1
    %s518 = scalar_lea.sflag [#allocation4], 1
    %519 = vsyncpa %s518, 1

</llo_original>
